<compile_context>
chip_gen: v7x
topology: tpu7x:2x2x1
jax: 0.10.0
libtpu: 0.0.40
codegen_flags: <defaults>
</compile_context>

<pallas_src>
import functools

import jax
import jax.numpy as jnp
from jax import lax
from jax.experimental import pallas as pl
from jax.experimental.pallas import tpu as pltpu


def _round_up(x, m):
    return ((x + m - 1) // m) * m


def _pick_lane_tile(total_lanes, max_tile):
    """Largest multiple-of-128 divisor of total_lanes that is <= max_tile, split
    into >= 2 tiles when possible so the parallel grid axis can feed both v7x TCs."""
    assert total_lanes % 128 == 0
    best = 128
    t = 128
    while t <= min(total_lanes, max_tile):
        if total_lanes % t == 0:
            best = t
        t += 128
    if best == total_lanes and total_lanes >= 256 and (total_lanes // 2) % 128 == 0:
        best = total_lanes // 2
    return best


# ------------------------------ Pallas kernel ------------------------------

def _conv_mss_kernel(x_ref, w_ref, o_ref, stack_ref, *,
                     k, img_w, c_in_p, l_tile, l_halo, activation):
    """One lane tile of the fused valid conv2d (no bias) + activation.

    x_ref    : (C_in_p, TOTAL_P)        bf16 packed batch, VMEM-resident (constant index)
    w_ref    : (C_out, k*k*C_in_p)      bf16 weight slab, VMEM-resident
    o_ref    : (C_out, l_tile)          output lane tile
    stack_ref: (k*k*C_in_p, l_tile)     bf16 VMEM scratch for the stacked RHS
    """
    t = pl.program_id(0)
    base = pl.multiple_of(t * l_tile, 128)
    # Load tile + halo once at a 128-aligned dynamic offset; each tap is then a
    # static lane slice of this window (no per-tap re-loads from VMEM).
    xw = x_ref[:, pl.ds(base, l_tile + l_halo)]
    for i in range(k * k):
        dx, dy = divmod(i, k)
        shift = dx * img_w + dy                      # flattened-HW shift of this tap
        stack_ref[pl.ds(i * c_in_p, c_in_p), :] = xw[:, shift:shift + l_tile]
    # Single MXU matmul: (C_out, k*k*C_in_p) x (k*k*C_in_p, l_tile), f32 accumulate.
    acc = jnp.dot(w_ref[...], stack_ref[...], preferred_element_type=jnp.float32)
    o_ref[...] = activation(acc).astype(o_ref.dtype)


# ------------------------------- JAX wrapper --------------------------------

def conv2d_mss(x_nchw, w, *, activation=None, compute_dtype=jnp.bfloat16,
               out_dtype=jnp.float32, max_lane_tile=2048):
    """Conv2DMSS.forward: activation(conv2d(x, w)), valid padding, stride 1, no bias."""
    if activation is None:
        activation = lambda a: jnp.maximum(a, 0.0)   # torch.relu (module default)

    N, C_in, H, W_img = x_nchw.shape
    C_out, C_in_w, kx, ky = w.shape
    assert C_in == C_in_w, f"{C_in} != {C_in_w}"
    assert kx == ky, "square kernels only (matches Conv2DMSS)"
    k = kx
    Ho, Wo = H - k + 1, W_img - k + 1
    HW = H * W_img
    assert HW % 128 == 0, "choose spatial size so H*W is a multiple of 128"

    C_in_p = _round_up(C_in, 8)                      # sublane-align channel dim
    K_p = k * k * C_in_p                             # contraction depth of the slab
    max_shift = (k - 1) * W_img + (k - 1)
    tail = _round_up(max_shift, 128)                 # shared zero halo for all images
    total = N * HW                                   # fused batch lane length
    total_p = total + tail

    l_tile = _pick_lane_tile(total, max_lane_tile)
    num_tiles = total // l_tile

    # Pack the whole batch along lanes: (C_in_p, N*HW + tail); image n occupies
    # lanes [n*HW, (n+1)*HW). Shifted reads that leak past an image's end only feed
    # output positions discarded by the valid-region slice below.
    x_flat = jnp.transpose(x_nchw, (1, 0, 2, 3)).reshape(C_in, total)
    x_flat = jnp.pad(x_flat, ((0, C_in_p - C_in), (0, tail))).astype(compute_dtype)

    # Weight slab (C_out, k*k*C_in_p): column i*C_in_p + ci holds w[:, ci, dx, dy]
    # with (dx, dy) = divmod(i, k); padded channel columns are zero.
    w_taps = jnp.transpose(w, (2, 3, 0, 1)).reshape(k * k, C_out, C_in)
    w_taps = jnp.pad(w_taps, ((0, 0), (0, 0), (0, C_in_p - C_in)))
    w_slab = jnp.transpose(w_taps, (1, 0, 2)).reshape(C_out, K_p).astype(compute_dtype)

    kernel = functools.partial(
        _conv_mss_kernel, k=k, img_w=W_img, c_in_p=C_in_p,
        l_tile=l_tile, l_halo=tail, activation=activation)

    out_flat = pl.pallas_call(
        kernel,
        out_shape=jax.ShapeDtypeStruct((C_out, total), out_dtype),
        grid_spec=pltpu.PrefetchScalarGridSpec(
            num_scalar_prefetch=0,
            grid=(num_tiles,),
            in_specs=[
                # Whole packed batch, constant block index -> copied in once and
                # kept VMEM-resident across lane tiles (gives every tile its halo).
                pl.BlockSpec((C_in_p, total_p), lambda t: (0, 0)),
                # Weight slab, constant index -> VMEM-resident.
                pl.BlockSpec((C_out, K_p), lambda t: (0, 0)),
            ],
            out_specs=pl.BlockSpec((C_out, l_tile), lambda t: (0, t)),
            scratch_shapes=[pltpu.VMEM((K_p, l_tile), compute_dtype)],
        ),
        compiler_params=pltpu.CompilerParams(
            dimension_semantics=("parallel",)),      # >=2 lane tiles feed both v7x TCs
        cost_estimate=pl.CostEstimate(
            flops=2 * N * C_out * C_in * k * k * Ho * Wo,
            transcendentals=0,
            bytes_accessed=(x_flat.size * x_flat.dtype.itemsize
                            + w_slab.size * w_slab.dtype.itemsize
                            + C_out * total * jnp.dtype(out_dtype).itemsize)),
    )(x_flat, w_slab)

    # (C_out, N*HW) -> (N, C_out, H, W), then keep the valid conv window.
    out = out_flat.reshape(C_out, N, H, W_img).transpose(1, 0, 2, 3)
    return out[:, :, :Ho, :Wo]


# ------------------- deterministic CPPN-style weight stand-in -------------------
# TODO(synk): the real CPPN generator networks cppn[offset + c](k_x, k_y, x_out)
# are construction-time sub-modules with no Pallas equivalent; replaced by a
# deterministic analytic function producing the same (C_out, C_in, k, k) tensor.

def _cppn_like_weights(C_out, C_in, k, offset=0):
    c = (jnp.arange(C_out * C_in, dtype=jnp.float32) + offset).reshape(C_out, C_in, 1, 1)
    kx = jnp.arange(k, dtype=jnp.float32).reshape(1, 1, k, 1)
    ky = jnp.arange(k, dtype=jnp.float32).reshape(1, 1, 1, k)
    w = jnp.sin(0.7 * kx + 1.3 * ky + 0.37 * c + 0.5)
    return (w / jnp.sqrt(float(C_in * k * k))).astype(jnp.float32)


# --------------------------------- reference ---------------------------------

def _reference(x_nchw, w):
    # Pure-JAX reference with the same bf16 operand rounding, f32 accumulation.
    xb = x_nchw.astype(jnp.bfloat16).astype(jnp.float32)
    wb = w.astype(jnp.bfloat16).astype(jnp.float32)
    y = lax.conv_general_dilated(
        xb, wb, window_strides=(1, 1), padding="VALID",
        dimension_numbers=("NCHW", "OIHW", "NCHW"),
        precision=lax.Precision.HIGHEST)
    return jnp.maximum(y, 0.0)


if __name__ == "__main__":
    key = jax.random.PRNGKey(0)
    N, C_in, H, W_img = 2, 4, 16, 16
    C_out, k = 8, 3

    x = jax.random.normal(key, (N, C_in, H, W_img), dtype=jnp.float32)
    w = _cppn_like_weights(C_out, C_in, k)

    fwd = jax.jit(conv2d_mss)
    out = jax.block_until_ready(fwd(x, w))
    ref = jax.block_until_ready(_reference(x, w))

    assert out.shape == (N, C_out, H - k + 1, W_img - k + 1), out.shape
    assert bool(jnp.all(jnp.isfinite(out)))
    assert bool(jnp.all(out >= 0.0))                               # relu range
    assert bool(jnp.allclose(out, ref, atol=1e-3, rtol=1e-3)), \
        float(jnp.max(jnp.abs(out - ref)))
    print("KERNEL_OK")
</pallas_src>

<mosaic_0001>
module attributes {stable_mosaic.version = 11 : i64} {
  func.func @_conv_mss_kernel(%arg0: i32, %arg1: memref<8x640xbf16, #tpu.memory_space<vmem>>, %arg2: memref<8x72xbf16, #tpu.memory_space<vmem>>, %arg3: memref<8x256xf32, #tpu.memory_space<vmem>>, %arg4: memref<72x256xbf16, #tpu.memory_space<vmem>>) attributes {dimension_semantics = [#tpu.dimension_semantics<parallel>], iteration_bounds = array<i64: 2>, scalar_prefetch = 0 : i64, scratch_operands = 1 : i64, tpu.core_type = #tpu.core_type<tc>, window_params = [{pipeline_mode = #tpu.pipeline_mode<synchronous>, transform_indices = @transform_0, window_bounds = array<i64: 8, 640>}, {pipeline_mode = #tpu.pipeline_mode<synchronous>, transform_indices = @transform_1, window_bounds = array<i64: 8, 72>}, {transform_indices = @transform_2, window_bounds = array<i64: 8, 256>}]} {
    %c256_i32 = arith.constant 256 : i32
    %0 = arith.muli %arg0, %c256_i32 : i32
    %1 = tpu.assume_multiple %0, 128 : i32
    %c0 = arith.constant 0 : index
    %2 = arith.index_cast %1 : i32 to index
    %3 = vector.load %arg1[%c0, %2] : memref<8x640xbf16, #tpu.memory_space<vmem>>, vector<8x384xbf16>
    %4 = vector.extract_strided_slice %3 {offsets = [0, 0], sizes = [8, 256], strides = [1, 1]} : vector<8x384xbf16> to vector<8x256xbf16>
    %c0_0 = arith.constant 0 : index
    %c0_1 = arith.constant 0 : index
    %5 = vector.load %arg4[%c0_0, %c0_1] : memref<72x256xbf16, #tpu.memory_space<vmem>>, vector<8x256xbf16>
    tpu.vector_store %arg4[%c0_0, %c0_1], %4 {strides = array<i32>} : memref<72x256xbf16, #tpu.memory_space<vmem>>, vector<8x256xbf16>,
    %6 = vector.extract_strided_slice %3 {offsets = [0, 1], sizes = [8, 256], strides = [1, 1]} : vector<8x384xbf16> to vector<8x256xbf16>
    %c8 = arith.constant 8 : index
    %c0_2 = arith.constant 0 : index
    %7 = vector.load %arg4[%c8, %c0_2] : memref<72x256xbf16, #tpu.memory_space<vmem>>, vector<8x256xbf16>
    tpu.vector_store %arg4[%c8, %c0_2], %6 {strides = array<i32>} : memref<72x256xbf16, #tpu.memory_space<vmem>>, vector<8x256xbf16>,
    %8 = vector.extract_strided_slice %3 {offsets = [0, 2], sizes = [8, 256], strides = [1, 1]} : vector<8x384xbf16> to vector<8x256xbf16>
    %c16 = arith.constant 16 : index
    %c0_3 = arith.constant 0 : index
    %9 = vector.load %arg4[%c16, %c0_3] : memref<72x256xbf16, #tpu.memory_space<vmem>>, vector<8x256xbf16>
    tpu.vector_store %arg4[%c16, %c0_3], %8 {strides = array<i32>} : memref<72x256xbf16, #tpu.memory_space<vmem>>, vector<8x256xbf16>,
    %10 = vector.extract_strided_slice %3 {offsets = [0, 16], sizes = [8, 256], strides = [1, 1]} : vector<8x384xbf16> to vector<8x256xbf16>
    %c24 = arith.constant 24 : index
    %c0_4 = arith.constant 0 : index
    %11 = vector.load %arg4[%c24, %c0_4] : memref<72x256xbf16, #tpu.memory_space<vmem>>, vector<8x256xbf16>
    tpu.vector_store %arg4[%c24, %c0_4], %10 {strides = array<i32>} : memref<72x256xbf16, #tpu.memory_space<vmem>>, vector<8x256xbf16>,
    %12 = vector.extract_strided_slice %3 {offsets = [0, 17], sizes = [8, 256], strides = [1, 1]} : vector<8x384xbf16> to vector<8x256xbf16>
    %c32 = arith.constant 32 : index
    %c0_5 = arith.constant 0 : index
    %13 = vector.load %arg4[%c32, %c0_5] : memref<72x256xbf16, #tpu.memory_space<vmem>>, vector<8x256xbf16>
    tpu.vector_store %arg4[%c32, %c0_5], %12 {strides = array<i32>} : memref<72x256xbf16, #tpu.memory_space<vmem>>, vector<8x256xbf16>,
    %14 = vector.extract_strided_slice %3 {offsets = [0, 18], sizes = [8, 256], strides = [1, 1]} : vector<8x384xbf16> to vector<8x256xbf16>
    %c40 = arith.constant 40 : index
    %c0_6 = arith.constant 0 : index
    %15 = vector.load %arg4[%c40, %c0_6] : memref<72x256xbf16, #tpu.memory_space<vmem>>, vector<8x256xbf16>
    tpu.vector_store %arg4[%c40, %c0_6], %14 {strides = array<i32>} : memref<72x256xbf16, #tpu.memory_space<vmem>>, vector<8x256xbf16>,
    %16 = vector.extract_strided_slice %3 {offsets = [0, 32], sizes = [8, 256], strides = [1, 1]} : vector<8x384xbf16> to vector<8x256xbf16>
    %c48 = arith.constant 48 : index
    %c0_7 = arith.constant 0 : index
    %17 = vector.load %arg4[%c48, %c0_7] : memref<72x256xbf16, #tpu.memory_space<vmem>>, vector<8x256xbf16>
    tpu.vector_store %arg4[%c48, %c0_7], %16 {strides = array<i32>} : memref<72x256xbf16, #tpu.memory_space<vmem>>, vector<8x256xbf16>,
    %18 = vector.extract_strided_slice %3 {offsets = [0, 33], sizes = [8, 256], strides = [1, 1]} : vector<8x384xbf16> to vector<8x256xbf16>
    %c56 = arith.constant 56 : index
    %c0_8 = arith.constant 0 : index
    %19 = vector.load %arg4[%c56, %c0_8] : memref<72x256xbf16, #tpu.memory_space<vmem>>, vector<8x256xbf16>
    tpu.vector_store %arg4[%c56, %c0_8], %18 {strides = array<i32>} : memref<72x256xbf16, #tpu.memory_space<vmem>>, vector<8x256xbf16>,
    %20 = vector.extract_strided_slice %3 {offsets = [0, 34], sizes = [8, 256], strides = [1, 1]} : vector<8x384xbf16> to vector<8x256xbf16>
    %c64 = arith.constant 64 : index
    %c0_9 = arith.constant 0 : index
    %21 = vector.load %arg4[%c64, %c0_9] : memref<72x256xbf16, #tpu.memory_space<vmem>>, vector<8x256xbf16>
    tpu.vector_store %arg4[%c64, %c0_9], %20 {strides = array<i32>} : memref<72x256xbf16, #tpu.memory_space<vmem>>, vector<8x256xbf16>,
    %c0_10 = arith.constant 0 : index
    %c0_11 = arith.constant 0 : index
    %22 = vector.load %arg2[%c0_10, %c0_11] : memref<8x72xbf16, #tpu.memory_space<vmem>>, vector<8x72xbf16>
    %c0_12 = arith.constant 0 : index
    %c0_13 = arith.constant 0 : index
    %23 = vector.load %arg4[%c0_12, %c0_13] : memref<72x256xbf16, #tpu.memory_space<vmem>>, vector<72x256xbf16>
    %cst = arith.constant dense<0.000000e+00> : vector<8x256xf32>
    %24 = tpu.matmul %22, %23, %cst {dimension_numbers = #tpu.dot_dimension_numbers<[1], [0], [0], [1], [0, 0, 1, 1], [], []>} : vector<8x72xbf16>, vector<72x256xbf16>, vector<8x256xf32> -> vector<8x256xf32>
    %cst_14 = arith.constant 0.000000e+00 : f32
    %25 = vector.broadcast %cst_14 : f32 to vector<8x256xf32>
    %26 = arith.maximumf %24, %25 : vector<8x256xf32>
    %c0_15 = arith.constant 0 : index
    %c0_16 = arith.constant 0 : index
    %27 = vector.load %arg3[%c0_15, %c0_16] : memref<8x256xf32, #tpu.memory_space<vmem>>, vector<8x256xf32>
    tpu.vector_store %arg3[%c0_15, %c0_16], %26 {strides = array<i32>} : memref<8x256xf32, #tpu.memory_space<vmem>>, vector<8x256xf32>,
    return
  }
  func.func @transform_0(%arg0: i32) -> (i32, i32) {
    %c0_i32 = arith.constant 0 : i32
    %c0_i32_0 = arith.constant 0 : i32
    %c0_i32_1 = arith.constant 0 : i32
    return %c0_i32, %c0_i32_0 : i32, i32
  }
  func.func @transform_1(%arg0: i32) -> (i32, i32) {
    %c0_i32 = arith.constant 0 : i32
    %c0_i32_0 = arith.constant 0 : i32
    %c0_i32_1 = arith.constant 0 : i32
    return %c0_i32, %c0_i32_0 : i32, i32
  }
  func.func @transform_2(%arg0: i32) -> (i32, i32) {
    %c0_i32 = arith.constant 0 : i32
    %c0_i32_0 = arith.constant 0 : i32
    return %c0_i32, %arg0 : i32, i32
  }
}

</mosaic_0001>

<llo_original>
// kernel: conv2d_mss.1
$region0: #{conv2d_mss.1}
  #allocation0 [shape = 'u32[]', space=smem, size = 0x4, offset = 0x4, fixed_abs, tag = 'smem constant byte address 0x4 - core index']
  #allocation1 [shape = 'u32[144,128]{1,0:T(1,128)}', space=vmem, size = 0x12000, scoped, tag = 'internal scratch']
  #allocation2 [shape = 'bf16[72,256]{1,0:T(8,128)(2,1)}', space=vmem, size = 0x9000, scoped, tag = 'scratch operand']
  %s0 = inlined_call_operand.vmem [shape: bf16[8,640], index: 0, kind: input, shape index: {}]
  %s1 = inlined_call_operand.vmem [shape: bf16[8,72], index: 1, kind: input, shape index: {}]
  %s2 = inlined_call_operand.vmem [shape: f32[8,512], index: 2, kind: output, shape index: {}]
  %s3 = sld [smem:[#allocation0]]
  $region41: #{conv2d_mss.1} parent=0
    _
  %s5 = ssub.s32 1, %s3
  %s6 = scalar_select 0, %s5, %s3
  loop: start=0, step=1, limit=4
  $region2: #{conv2d_mss.1} parent=0 // loop_pre_header
    _
  $region3: #{conv2d_mss.1} parent=0 // loop_header
    %s8 = sphi 0, %s12
    %p9 = scmp.ge.s32.totalorder %s8, 4
    %s16 = sphi 0, %s16
    %s18 = sphi 0, %s16
    %s19 = sphi 0, %s18
    %s33 = sphi 0, %s19
    %s37 = sphi 0, %s37
    %s39 = sphi 0, %s37
    %s40 = sphi 0, %s39
    %s54 = sphi 0, %s40
    %s60 = sphi 0, %s62
    %s63 = sphi 0, %s60
    %s64 = sphi 0, %s63
    %s80 = sphi 0, %s64
  $region4: #{conv2d_mss.1} parent=0 // loop_header_branch
    %11 = sbr.rel (%p9) target = $region8
  $region5: #{conv2d_mss.1} parent=0 // loop_body
    %s13 = ssub.s32 %s8, 1
    %s14 = ssub.s32 %s8, 2
    %s15 = sadd.s32 %s8, 1
    %s17 = sadd.s32 %s16, 1
    %p20 = scmp.eq.s32.totalorder %s8, 1
    %p21 = scmp.ne.s32.totalorder %s16, %s18
    %p22 = scmp.eq.s32.totalorder %s8, 0
    %p23 = por %p21, %p22
    %p24 = scmp.ne.s32.totalorder %s16, %s18
    %p25 = scmp.eq.s32.totalorder %s13, 1
    %p26 = por %p24, %p25
    %p27 = scmp.ne.s32.totalorder %s18, %s19
    %p28 = scmp.eq.s32.totalorder %s13, 0
    %p29 = por %p27, %p28
    %p30 = scmp.ne.s32.totalorder %s18, %s19
    %p31 = scmp.eq.s32.totalorder %s14, 1
    %p32 = por %p30, %p31
    %p34 = scmp.ne.s32.totalorder %s19, %s33
    %p35 = scmp.eq.s32.totalorder %s14, 0
    %p36 = por %p34, %p35
    %s38 = sadd.s32 %s37, 1
    %p41 = scmp.eq.s32.totalorder %s8, 1
    %p42 = scmp.ne.s32.totalorder %s37, %s39
    %p43 = scmp.eq.s32.totalorder %s8, 0
    %p44 = por %p42, %p43
    %p45 = scmp.ne.s32.totalorder %s37, %s39
    %p46 = scmp.eq.s32.totalorder %s13, 1
    %p47 = por %p45, %p46
    %p48 = scmp.ne.s32.totalorder %s39, %s40
    %p49 = scmp.eq.s32.totalorder %s13, 0
    %p50 = por %p48, %p49
    %p51 = scmp.ne.s32.totalorder %s39, %s40
    %p52 = scmp.eq.s32.totalorder %s14, 1
    %p53 = por %p51, %p52
    %p55 = scmp.ne.s32.totalorder %s40, %s54
    %p56 = scmp.eq.s32.totalorder %s14, 0
    %p57 = por %p55, %p56
    %s58 = ssub.s32 %s8, %s15
    %p59 = scmp.eq.s32.totalorder %s58, 0
    %s61 = sadd.s32 %s60, 1
    %s62 = scalar_select %p59, %s60, %s61
    %p65 = pneg %p59
    %p66 = scmp.eq.s32.totalorder %s8, 1
    %p67 = por %p65, %p66
    %p68 = scmp.ne.s32.totalorder %s60, %s63
    %p69 = scmp.eq.s32.totalorder %s8, 0
    %p70 = por %p68, %p69
    %p71 = scmp.ne.s32.totalorder %s60, %s63
    %p72 = scmp.eq.s32.totalorder %s13, 1
    %p73 = por %p71, %p72
    %p74 = scmp.ne.s32.totalorder %s63, %s64
    %p75 = scmp.eq.s32.totalorder %s13, 0
    %p76 = por %p74, %p75
    %p77 = scmp.ne.s32.totalorder %s63, %s64
    %p78 = scmp.eq.s32.totalorder %s14, 1
    %p79 = por %p77, %p78
    %p81 = scmp.ne.s32.totalorder %s64, %s80
    %p82 = scmp.eq.s32.totalorder %s14, 0
    %p83 = por %p81, %p82
    %p84 = scmp.le.s32.totalorder 1, %s8
    %p85 = scmp.lt.s32.totalorder %s8, 3
    %p86 = pnand %p84, %p85
    %p87 = pneg %p86
    // Predicated region
    $region9: #{conv2d_mss.1} parent=5 // pred_check
      _
    $region10: #{conv2d_mss.1} parent=5 // pred_check_branch
      %89 = sbr.rel (%p86) target = $region12
    $region11: #{conv2d_mss.1} parent=5 // pred_region
      %s90 = ssub.s32 %s8, 1
      // Predicated region
      $region13: #{conv2d_mss.1} parent=11 // pred_check
        %p91 = pneg %p29
      $region14: #{conv2d_mss.1} parent=11 // pred_check_branch
        %93 = sbr.rel (%p91) target = $region16
      $region15: #{conv2d_mss.1} parent=11 // pred_region
        _
      $region16: #{conv2d_mss.1} parent=11 // pred_fallthru
        _
      // Predicated region
      $region17: #{conv2d_mss.1} parent=11 // pred_check
        %p94 = pneg %p50
      $region18: #{conv2d_mss.1} parent=11 // pred_check_branch
        %96 = sbr.rel (%p94) target = $region20
      $region19: #{conv2d_mss.1} parent=11 // pred_region
        _
      $region20: #{conv2d_mss.1} parent=11 // pred_fallthru
        _
    $region12: #{conv2d_mss.1} parent=5 // pred_fallthru
      _
    %p97 = scmp.lt.s32.totalorder %s8, 2
    // Predicated region
    $region21: #{conv2d_mss.1} parent=5 // pred_check
      %p98 = pneg %p97
    $region22: #{conv2d_mss.1} parent=5 // pred_check_branch
      %100 = sbr.rel (%p98) target = $region24
    $region23: #{conv2d_mss.1} parent=5 // pred_region
      _
    $region24: #{conv2d_mss.1} parent=5 // pred_fallthru
      _
    %p101 = scmp.le.s32.totalorder 1, %s8
    %p102 = scmp.lt.s32.totalorder %s8, 3
    %p103 = pnand %p101, %p102
    %p104 = pneg %p103
    // Predicated region
    $region25: #{conv2d_mss.1} parent=5 // pred_check
      _
    $region26: #{conv2d_mss.1} parent=5 // pred_check_branch
      %106 = sbr.rel (%p103) target = $region28
    $region27: #{conv2d_mss.1} parent=5 // pred_region
      %s107 = ssub.s32 %s8, 1
      %p108 = pneg %p29
      %p109 = pneg %p26
      %p110 = pneg %p50
      %p111 = pneg %p47
      %p112 = pneg %p76
      %p113 = pneg %p73
      %s114 = smul.u32 2, %s13
      %p115 = scmp.lt.s32.totalorder %s114, 3
      %s116 = scalar_select %p115, %s114, 3
      %s117 = smul.addr %s116, 8
      %s118 = scalar_lea.vmem %s2, %s117
      %s119 = smul.u32 2, %s13
      %p120 = scmp.lt.s32.totalorder %s119, 3
      %s121 = scalar_select %p120, %s119, 3
      %s122 = smul.addr %s121, 8
      %s123 = scalar_lea.vmem %s2, %s122
      %s124 = smul.u32 2, %s13
      %s126 = smul.u32 %s13, 256
      %s127 = sshra.s32 %s126, 7
      %s128 = sand.u32 %s126, 127
      %s129 = smul.addr %s127, 4
      %s130 = scalar_lea.vmem %s0, %s129
      %v131 = vld [vmem:[%s130] sm:$0xff]
      %v132 = vld [vmem:[%s130 + $0x8] sm:$0xf]
      %133 = vst [vmem:[#allocation2] sm:$0xff] %v131
      %136 = vrot.lane.b32.xlu0 %v131, 127
      %v137 = vpop.permute.xlu0 %136
      %138 = vrot.lane.b32.xlu0 %v132, 127
      %v139 = vpop.permute.xlu0 %138
      %v140 = vrot.slane %v137, 4
      %v141 = vrot.slane %v139, 4
      %vm142 = vcmask 1043456
      %v143 = vsel %vm142, %v140, %v141
      %vm144 = vcmask 1039360
      %v145 = vsel %vm144, %v137, %v143
      %147 = vst [vmem:[#allocation2 + $0x8] sm:$0xff] %v145
      %148 = vrot.lane.b32.xlu0 %v131, 126
      %v149 = vpop.permute.xlu0 %148
      %150 = vrot.lane.b32.xlu0 %v132, 126
      %v151 = vpop.permute.xlu0 %150
      %v152 = vrot.slane %v149, 4
      %v153 = vrot.slane %v151, 4
      %v154 = vsel %vm142, %v152, %v153
      %vm155 = vcmask 1031168
      %v156 = vsel %vm155, %v149, %v154
      %158 = vst [vmem:[#allocation2 + $0x10] sm:$0xff] %v156
      %159 = vrot.lane.b32.xlu0 %v131, 112
      %v160 = vpop.permute.xlu0 %159
      %161 = vrot.lane.b32.xlu0 %v132, 112
      %v162 = vpop.permute.xlu0 %161
      %v163 = vrot.slane %v160, 4
      %v164 = vrot.slane %v162, 4
      %v165 = vsel %vm142, %v163, %v164
      %vm166 = vcmask 916480
      %v167 = vsel %vm166, %v160, %v165
      %169 = vst [vmem:[#allocation2 + $0x18] sm:$0xff] %v167
      %170 = vrot.lane.b32.xlu0 %v131, 111
      %v171 = vpop.permute.xlu0 %170
      %172 = vrot.lane.b32.xlu0 %v132, 111
      %v173 = vpop.permute.xlu0 %172
      %v174 = vrot.slane %v171, 4
      %v175 = vrot.slane %v173, 4
      %v176 = vsel %vm142, %v174, %v175
      %vm177 = vcmask 908288
      %v178 = vsel %vm177, %v171, %v176
      %180 = vst [vmem:[#allocation2 + $0x20] sm:$0xff] %v178
      %181 = vrot.lane.b32.xlu0 %v131, 110
      %v182 = vpop.permute.xlu0 %181
      %183 = vrot.lane.b32.xlu0 %v132, 110
      %v184 = vpop.permute.xlu0 %183
      %v185 = vrot.slane %v182, 4
      %v186 = vrot.slane %v184, 4
      %v187 = vsel %vm142, %v185, %v186
      %vm188 = vcmask 900096
      %v189 = vsel %vm188, %v182, %v187
      %191 = vst [vmem:[#allocation2 + $0x28] sm:$0xff] %v189
      %192 = vrot.lane.b32.xlu0 %v131, 96
      %v193 = vpop.permute.xlu0 %192
      %194 = vrot.lane.b32.xlu0 %v132, 96
      %v195 = vpop.permute.xlu0 %194
      %v196 = vrot.slane %v193, 4
      %v197 = vrot.slane %v195, 4
      %v198 = vsel %vm142, %v196, %v197
      %vm199 = vcmask 785408
      %v200 = vsel %vm199, %v193, %v198
      %202 = vst [vmem:[#allocation2 + $0x30] sm:$0xff] %v200
      %203 = vrot.lane.b32.xlu0 %v131, 95
      %v204 = vpop.permute.xlu0 %203
      %205 = vrot.lane.b32.xlu0 %v132, 95
      %v206 = vpop.permute.xlu0 %205
      %v207 = vrot.slane %v204, 4
      %v208 = vrot.slane %v206, 4
      %v209 = vsel %vm142, %v207, %v208
      %vm210 = vcmask 777216
      %v211 = vsel %vm210, %v204, %v209
      %213 = vst [vmem:[#allocation2 + $0x38] sm:$0xff] %v211
      %214 = vrot.lane.b32.xlu0 %v131, 94
      %v215 = vpop.permute.xlu0 %214
      %216 = vrot.lane.b32.xlu0 %v132, 94
      %v217 = vpop.permute.xlu0 %216
      %v218 = vrot.slane %v215, 4
      %v219 = vrot.slane %v217, 4
      %v220 = vsel %vm142, %v218, %v219
      %vm221 = vcmask 769024
      %v222 = vsel %vm221, %v215, %v220
      %224 = vst [vmem:[#allocation2 + $0x40] sm:$0xff] %v222
      %v225 = vld [vmem:[%s1] sm:$0xf]
      %v226 = vld [vmem:[#allocation2] sm:$0xff]
      %v227 = vld [vmem:[#allocation2 + $0x8] sm:$0xff]
      %v228 = vld [vmem:[#allocation2 + $0x10] sm:$0xff]
      %v229 = vld [vmem:[#allocation2 + $0x18] sm:$0xff]
      %v230 = vld [vmem:[#allocation2 + $0x20] sm:$0xff]
      %v231 = vld [vmem:[#allocation2 + $0x28] sm:$0xff]
      %v232 = vld [vmem:[#allocation2 + $0x30] sm:$0xff]
      %v233 = vld [vmem:[#allocation2 + $0x38] sm:$0xff]
      %v234 = vld [vmem:[#allocation2 + $0x40] sm:$0xff]
      %v244 = vunpack.c.l.b16 %v226
      %v245 = vunpack.c.h.b16 %v226
      %v246 = vunpack.c.l.b16 %v227
      %v247 = vunpack.c.h.b16 %v227
      %v248 = vunpack.c.l.b16 %v228
      %v249 = vunpack.c.h.b16 %v228
      %v250 = vunpack.c.l.b16 %v229
      %v251 = vunpack.c.h.b16 %v229
      %v252 = vunpack.c.l.b16 %v230
      %v253 = vunpack.c.h.b16 %v230
      %v254 = vunpack.c.l.b16 %v231
      %v255 = vunpack.c.h.b16 %v231
      %v256 = vunpack.c.l.b16 %v232
      %v257 = vunpack.c.h.b16 %v232
      %v258 = vunpack.c.l.b16 %v233
      %v259 = vunpack.c.h.b16 %v233
      %v260 = vunpack.c.l.b16 %v234
      %v261 = vunpack.c.h.b16 %v234
      %v262 = vpack.c.b16 %v246, %v244
      %v263 = vpack.c.b16 %v247, %v245
      %v264 = vpack.c.b16 %v250, %v248
      %v265 = vpack.c.b16 %v251, %v249
      %v266 = vpack.c.b16 %v254, %v252
      %v267 = vpack.c.b16 %v255, %v253
      %v268 = vpack.c.b16 %v258, %v256
      %v269 = vpack.c.b16 %v259, %v257
      %v270 = vpack.c.b16 %v260, %v260
      %v271 = vpack.c.b16 %v261, %v261
      %vm280 = vcmask 588800
      %v282 = vsel %vm280, %v225, 0
      %vm284 = vcmask 1043456
      %v286 = vsel %vm284, %v270, 0
      %v289 = vsel %vm284, %v271, 0
      %291 = vmatprep.subr.bf16.mxu0 %v263
      %292 = vmatpush1.bf16.msra.mxu0 %v262
      %293 = vmatprep.subr.bf16.mxu0 %v265
      %294 = vmatpush1.bf16.msra.mxu0 %v264
      %295 = vmatprep.subr.bf16.mxu0 %v267
      %296 = vmatpush1.bf16.msra.mxu0 %v266
      %297 = vmatprep.subr.bf16.mxu0 %v269
      %298 = vmatpush1.bf16.msra.mxu0 %v268
      %299 = vmatprep.subr.bf16.mxu0 %v289
      %300 = vmatpush1.bf16.msra.mxu0 %v286
      %301 = vmatprep.subr.bf16.mxu0 0
      %302 = vmatpush1.bf16.msra.mxu0 0
      %303 = vmatprep.subr.bf16.mxu0 0
      %304 = vmatpush1.bf16.msra.mxu0 0
      %305 = vmatprep.subr.bf16.mxu0 0
      %306 = vmatpush1.bf16.msra.mxu0 0
      %307 = vmatprep.subr.bf16.mxu0 0
      %308 = vmatpush1.bf16.msra.mxu0 0
      %309 = vmatprep.subr.bf16.mxu0 0
      %310 = vmatpush1.bf16.msra.mxu0 0
      %311 = vmatprep.subr.bf16.mxu0 0
      %312 = vmatpush1.bf16.msra.mxu0 0
      %313 = vmatprep.subr.bf16.mxu0 0
      %314 = vmatpush1.bf16.msra.mxu0 0
      %315 = vmatprep.subr.bf16.mxu0 0
      %316 = vmatpush1.bf16.msra.mxu0 0
      %317 = vmatprep.subr.bf16.mxu0 0
      %318 = vmatpush1.bf16.msra.mxu0 0
      %319 = vmatprep.subr.bf16.mxu0 0
      %320 = vmatpush1.bf16.msra.mxu0 0
      %321 = vmatprep.subr.bf16.mxu0 0
      %322 = vmatpush1.bf16.msra.mxu0 0
      %323 = vmatprep.mubr.bf16.mxu0 0
      %324 = vmatmul.mubr.bf16.gmra.mrb[0].mxu0 %v282
      %v325 = vpop.f32.mrb[0].mxu0
      %v326 = vadd.f32 0.0, %v325
      %v327 = vpop.f32.mrb[0].mxu0
      %v328 = vadd.f32 0.0, %v327
      %v329 = vpop.f32.mrb[0].mxu0
      %v330 = vpop.f32.mrb[0].mxu0
      %331 = vdwg.mxu0
      %v332 = vmax.f32 %v326, 0.0
      %v333 = vmax.f32 %v328, 0.0
      %334 = vst [vmem:[%s123] sm:$0xff] %v332
      %335 = vst [vmem:[%s123 + $0x8] sm:$0xff] %v333
      %s336 = smul.u32 2, %s13
      %p337 = scmp.lt.s32.totalorder %s336, 3
      %s338 = scalar_select %p337, %s336, 3
      %s339 = smul.addr %s338, 8
      %s340 = scalar_lea.vmem %s2, %s339
      // Predicated region
      $region29: #{conv2d_mss.1} parent=27 // pred_check
        %p341 = pneg %p73
      $region30: #{conv2d_mss.1} parent=27 // pred_check_branch
        %343 = sbr.rel (%p341) target = $region32
      $region31: #{conv2d_mss.1} parent=27 // pred_region
        %s344 = smul.u32 2, %s13
      $region32: #{conv2d_mss.1} parent=27 // pred_fallthru
        _
    $region28: #{conv2d_mss.1} parent=5 // pred_fallthru
      _
    %p345 = scmp.le.s32.totalorder 2, %s8
    // Predicated region
    $region33: #{conv2d_mss.1} parent=5 // pred_check
      %p346 = pneg %p345
    $region34: #{conv2d_mss.1} parent=5 // pred_check_branch
      %348 = sbr.rel (%p346) target = $region36
    $region35: #{conv2d_mss.1} parent=5 // pred_region
      %s349 = ssub.s32 %s8, 2
      // Predicated region
      $region37: #{conv2d_mss.1} parent=35 // pred_check
        %p350 = pneg %p79
      $region38: #{conv2d_mss.1} parent=35 // pred_check_branch
        %352 = sbr.rel (%p350) target = $region40
      $region39: #{conv2d_mss.1} parent=35 // pred_region
        %s353 = smul.u32 2, %s14
        %p354 = scmp.lt.s32.totalorder %s353, 3
        %s355 = scalar_select %p354, %s353, 3
        %s356 = smul.addr %s355, 8
        %s357 = scalar_lea.vmem %s2, %s356
      $region40: #{conv2d_mss.1} parent=35 // pred_fallthru
        _
    $region36: #{conv2d_mss.1} parent=5 // pred_fallthru
      _
  $region6: #{conv2d_mss.1} parent=0 // loop_footer
    %s12 = sadd.s32 1, %s8
  $region7: #{conv2d_mss.1} parent=0 // loop_footer_branch
    %7 = sbr.rel target = $region3
  $region8: #{conv2d_mss.1} parent=0 // loop_exit
    _

</llo_original>
